<compile_context>
chip_gen: v7x
topology: tpu7x:2x2x1
jax: 0.10.0
libtpu: 0.0.40
codegen_flags: <defaults>
</compile_context>

<pallas_src>
import functools

import jax
import jax.numpy as jnp
import numpy as np
from jax.experimental import pallas as pl
from jax.experimental.pallas import tpu as pltpu


def plastic_predictor_kernel(
    # inputs
    x_ref, hid0_ref, hebb0_ref,
    wx_ref, wh_ref, alpha_ref, bh_ref,
    gamma_ref, beta_ref,
    wo_ref, bo_ref, el_ref,
    # outputs
    hid_out_ref, hebb_out_ref, y_ref,
    # scratch (recurrent carry, resident in VMEM across the whole T loop)
    hid_s, hebb_s,
):
    t = pl.program_id(1)

    # Load the initial state once per batch tile.
    @pl.when(t == 0)
    def _init():
        hid_s[...] = hid0_ref[...]
        hebb_s[...] = hebb0_ref[...]

    x = x_ref[0]                       # (bb, nin)
    hid = hid_s[...]                   # (bb, H)
    hebb = hebb_s[...]                 # (bb, H, H)  f32 carry (no bf16 decay drift)
    eta = el_ref[0, 0]
    lam = el_ref[0, 1]

    # Recurrence split: shared Wh matmul on the MXU; only the per-sample plastic
    # alpha*hebb contraction stays on the VPU (no [B,H,H] plastic_w temporary).
    rec = jnp.dot(hid, wh_ref[...], preferred_element_type=jnp.float32)
    rec = rec + jnp.sum(hid[:, :, None] * (alpha_ref[...][None, :, :] * hebb), axis=1)

    pre = jnp.dot(x, wx_ref[...], preferred_element_type=jnp.float32) + rec + bh_ref[...]

    # LayerNorm over the hidden dimension (ln=True), eps matches nn.LayerNorm default.
    mean = jnp.mean(pre, axis=-1, keepdims=True)
    var = jnp.mean((pre - mean) ** 2, axis=-1, keepdims=True)
    pre_ln = (pre - mean) * jax.lax.rsqrt(var + 1e-5) * gamma_ref[...] + beta_ref[...]
    hid_new = jnp.tanh(pre_ln)                                           # (bb, H)

    # Hebbian trace update: decay + outer(pre-hid, post-hid), fused expression.
    hebb_new = lam * hebb + eta * (hid[:, :, None] * hid_new[:, None, :])

    hid_s[...] = hid_new
    hebb_s[...] = hebb_new

    # Readout (self.out) on a lane-dense (padded) output slab, one row per timestep.
    y_ref[0] = jnp.dot(hid_new, wo_ref[...], preferred_element_type=jnp.float32) + bo_ref[...]

    # Only the final recurrent state leaves VMEM.
    @pl.when(t == pl.num_programs(1) - 1)
    def _final():
        hid_out_ref[...] = hid_new
        hebb_out_ref[...] = hebb_new


def plastic_predictor_scan(xs, hid0, hebb0, p, batch_tile=None):
    """Run the plastic RNN over xs[T, B, nin]; returns (hid_T, hebb_T, y[T, B, nout])."""
    T, B, nin = xs.shape
    H = hid0.shape[1]
    nout = p["wo"].shape[1]

    # Lane-dense readout: pad the output feature dim to a multiple of 128.
    nout_pad = max(128, ((nout + 127) // 128) * 128)
    wo, bo = p["wo"], p["bo"]
    if nout_pad != nout:
        wo = jnp.pad(wo, ((0, 0), (0, nout_pad - nout)))
        bo = jnp.pad(bo, ((0, 0), (0, nout_pad - nout)))

    # Batch tiling: whole batch per tile for small B; multiples of 8 otherwise so the
    # (sublane, lane) block constraints hold and the 'parallel' axis shards on v7x.
    if batch_tile is None:
        batch_tile = B if (B < 16 or B % 8 != 0) else 8
    assert B % batch_tile == 0 and (batch_tile == B or batch_tile % 8 == 0)
    nb = B // batch_tile

    # eta / lamda merged into one SMEM scalar array.
    eta_lam = jnp.concatenate(
        [p["eta"].reshape(1, 1), p["lam"].reshape(1, 1)], axis=1
    ).astype(jnp.float32)

    grid = (nb, T)
    full = lambda b, t: (0, 0)

    in_specs = [
        pl.BlockSpec((1, batch_tile, nin), lambda b, t: (t, b, 0)),       # xs
        pl.BlockSpec((batch_tile, H), lambda b, t: (b, 0)),               # hid0
        pl.BlockSpec((batch_tile, H, H), lambda b, t: (b, 0, 0)),         # hebb0
        pl.BlockSpec((nin, H), full),                                     # Wx
        pl.BlockSpec((H, H), full),                                       # Wh
        pl.BlockSpec((H, H), full),                                       # alpha
        pl.BlockSpec((1, H), full),                                       # bh
        pl.BlockSpec((1, H), full),                                       # gamma
        pl.BlockSpec((1, H), full),                                       # beta
        pl.BlockSpec((H, nout_pad), full),                                # Wout (padded)
        pl.BlockSpec((1, nout_pad), full),                                # bout (padded)
        pl.BlockSpec((1, 2), full, memory_space=pltpu.MemorySpace.SMEM),  # eta/lamda
    ]
    out_specs = (
        pl.BlockSpec((batch_tile, H), lambda b, t: (b, 0)),               # hid_T
        pl.BlockSpec((batch_tile, H, H), lambda b, t: (b, 0, 0)),         # hebb_T
        pl.BlockSpec((1, batch_tile, nout_pad), lambda b, t: (t, b, 0)),  # y
    )
    out_shape = (
        jax.ShapeDtypeStruct((B, H), jnp.float32),
        jax.ShapeDtypeStruct((B, H, H), jnp.float32),
        jax.ShapeDtypeStruct((T, B, nout_pad), jnp.float32),
    )
    scratch_shapes = [
        pltpu.VMEM((batch_tile, H), jnp.float32),      # hid carry
        pltpu.VMEM((batch_tile, H, H), jnp.float32),   # hebb carry (f32)
    ]

    hid_new, hebb_new, y_pad = pl.pallas_call(
        plastic_predictor_kernel,
        out_shape=out_shape,
        grid_spec=pltpu.PrefetchScalarGridSpec(
            num_scalar_prefetch=0,
            grid=grid,
            in_specs=in_specs,
            out_specs=out_specs,
            scratch_shapes=scratch_shapes,
        ),
        # hid0 -> hid_T, hebb0 -> hebb_T updated in place (no second B*H*H buffer).
        input_output_aliases={1: 0, 2: 1},
        compiler_params=pltpu.CompilerParams(
            dimension_semantics=("parallel", "arbitrary"),
        ),
    )(xs, hid0, hebb0, p["wx"], p["wh"], p["alpha"], p["bh"],
      p["gamma"], p["beta"], wo, bo, eta_lam)

    return hid_new, hebb_new, y_pad[..., :nout]


def init_params(key, nin, nhid, nout):
    ks = jax.random.split(key, 5)
    scale_in = 1.0 / np.sqrt(nin)
    scale_h = 1.0 / np.sqrt(nhid)
    return {
        "wx": jax.random.uniform(ks[0], (nin, nhid), jnp.float32, -scale_in, scale_in),
        "wh": jax.random.uniform(ks[1], (nhid, nhid), jnp.float32, -scale_h, scale_h),
        "alpha": jax.random.uniform(ks[2], (nhid, nhid), jnp.float32, -0.01, 0.01),
        "bh": jnp.zeros((1, nhid), jnp.float32),
        "gamma": jnp.ones((1, nhid), jnp.float32),
        "beta": jnp.zeros((1, nhid), jnp.float32),
        "wo": jax.random.uniform(ks[3], (nhid, nout), jnp.float32, -scale_h, scale_h),
        "bo": jax.random.uniform(ks[4], (1, nout), jnp.float32, -scale_h, scale_h),
        "eta": jnp.full((1, 1), 0.05, jnp.float32),
        "lam": jnp.full((1, 1), 0.95, jnp.float32),
    }


def reference_scan(xs, hid, hebb, p):
    """Pure-JAX reference: per-step plastic RNN + readout, scanned over time."""
    ys = []
    for t in range(xs.shape[0]):
        plastic_w = p["wh"][None] + p["alpha"][None] * hebb
        rec = jnp.einsum("bh,bhk->bk", hid, plastic_w)
        pre = xs[t] @ p["wx"] + rec + p["bh"]
        mean = jnp.mean(pre, axis=-1, keepdims=True)
        var = jnp.mean((pre - mean) ** 2, axis=-1, keepdims=True)
        pre_ln = (pre - mean) * jax.lax.rsqrt(var + 1e-5) * p["gamma"] + p["beta"]
        hid_new = jnp.tanh(pre_ln)
        hebb = p["lam"][0, 0] * hebb + p["eta"][0, 0] * (hid[:, :, None] * hid_new[:, None, :])
        hid = hid_new
        ys.append(hid_new @ p["wo"] + p["bo"])
    return hid, hebb, jnp.stack(ys)


if __name__ == "__main__":
    T, B, nin, nhid, nout = 8, 2, 16, 32, 8

    key = jax.random.PRNGKey(0)
    kp, kx = jax.random.split(key)
    params = init_params(kp, nin, nhid, nout)
    xs = jax.random.normal(kx, (T, B, nin), jnp.float32)

    # initialZeroState / initialZeroHebb (separate copies: hid0/hebb0 are donated
    # into the kernel via input_output_aliases).
    hid0_k = jnp.zeros((B, nhid), jnp.float32)
    hebb0_k = jnp.zeros((B, nhid, nhid), jnp.float32)

    hid_k, hebb_k, y_k = plastic_predictor_scan(xs, hid0_k, hebb0_k, params)
    jax.block_until_ready((hid_k, hebb_k, y_k))

    hid_r = jnp.zeros((B, nhid), jnp.float32)
    hebb_r = jnp.zeros((B, nhid, nhid), jnp.float32)
    hid_r, hebb_r, y_r = reference_scan(xs, hid_r, hebb_r, params)

    np.testing.assert_allclose(np.asarray(hid_k), np.asarray(hid_r), atol=2e-5, rtol=1e-4)
    np.testing.assert_allclose(np.asarray(hebb_k), np.asarray(hebb_r), atol=2e-5, rtol=1e-4)
    np.testing.assert_allclose(np.asarray(y_k), np.asarray(y_r), atol=2e-5, rtol=1e-4)

    print("KERNEL_OK")
</pallas_src>

<mosaic_0001>
module attributes {stable_mosaic.version = 11 : i64} {
  func.func @plastic_predictor_kernel(%arg0: i32, %arg1: i32, %arg2: memref<1x2x16xf32, #tpu.memory_space<vmem>>, %arg3: memref<2x32xf32, #tpu.memory_space<vmem>>, %arg4: memref<2x32x32xf32, #tpu.memory_space<vmem>>, %arg5: memref<16x32xf32, #tpu.memory_space<vmem>>, %arg6: memref<32x32xf32, #tpu.memory_space<vmem>>, %arg7: memref<32x32xf32, #tpu.memory_space<vmem>>, %arg8: memref<1x32xf32, #tpu.memory_space<vmem>>, %arg9: memref<1x32xf32, #tpu.memory_space<vmem>>, %arg10: memref<1x32xf32, #tpu.memory_space<vmem>>, %arg11: memref<32x128xf32, #tpu.memory_space<vmem>>, %arg12: memref<1x128xf32, #tpu.memory_space<vmem>>, %arg13: memref<1x2xf32, #tpu.memory_space<smem>>, %arg14: memref<2x32xf32, #tpu.memory_space<vmem>>, %arg15: memref<2x32x32xf32, #tpu.memory_space<vmem>>, %arg16: memref<1x2x128xf32, #tpu.memory_space<vmem>>, %arg17: memref<2x32xf32, #tpu.memory_space<vmem>>, %arg18: memref<2x32x32xf32, #tpu.memory_space<vmem>>) attributes {dimension_semantics = [#tpu.dimension_semantics<parallel>, #tpu.dimension_semantics<arbitrary>], iteration_bounds = array<i64: 1, 8>, scalar_prefetch = 0 : i64, scratch_operands = 2 : i64, tpu.core_type = #tpu.core_type<tc>, window_params = [{transform_indices = @transform_0, window_bounds = array<i64: 1, 2, 16>}, {transform_indices = @transform_1, window_bounds = array<i64: 2, 32>}, {transform_indices = @transform_2, window_bounds = array<i64: 2, 32, 32>}, {pipeline_mode = #tpu.pipeline_mode<synchronous>, transform_indices = @transform_3, window_bounds = array<i64: 16, 32>}, {pipeline_mode = #tpu.pipeline_mode<synchronous>, transform_indices = @transform_4, window_bounds = array<i64: 32, 32>}, {pipeline_mode = #tpu.pipeline_mode<synchronous>, transform_indices = @transform_5, window_bounds = array<i64: 32, 32>}, {pipeline_mode = #tpu.pipeline_mode<synchronous>, transform_indices = @transform_6, window_bounds = array<i64: 1, 32>}, {pipeline_mode = #tpu.pipeline_mode<synchronous>, transform_indices = @transform_7, window_bounds = array<i64: 1, 32>}, {pipeline_mode = #tpu.pipeline_mode<synchronous>, transform_indices = @transform_8, window_bounds = array<i64: 1, 32>}, {pipeline_mode = #tpu.pipeline_mode<synchronous>, transform_indices = @transform_9, window_bounds = array<i64: 32, 128>}, {pipeline_mode = #tpu.pipeline_mode<synchronous>, transform_indices = @transform_10, window_bounds = array<i64: 1, 128>}, {transform_indices = @transform_11, window_bounds = array<i64: 1, 2>}, {transform_indices = @transform_12, window_bounds = array<i64: 2, 32>}, {transform_indices = @transform_13, window_bounds = array<i64: 2, 32, 32>}, {transform_indices = @transform_14, window_bounds = array<i64: 1, 2, 128>}]} {
    %c0_i32 = arith.constant 0 : i32
    %0 = arith.cmpi eq, %arg1, %c0_i32 : i32
    %1 = arith.extui %0 : i1 to i32
    %c0_i32_0 = arith.constant 0 : i32
    %2 = arith.cmpi ne, %1, %c0_i32_0 : i32
    scf.if %2 {
      %c0_44 = arith.constant 0 : index
      %c0_45 = arith.constant 0 : index
      %74 = vector.load %arg3[%c0_44, %c0_45] : memref<2x32xf32, #tpu.memory_space<vmem>>, vector<2x32xf32>
      %c0_46 = arith.constant 0 : index
      %c0_47 = arith.constant 0 : index
      %75 = vector.load %arg17[%c0_46, %c0_47] : memref<2x32xf32, #tpu.memory_space<vmem>>, vector<2x32xf32>
      tpu.vector_store %arg17[%c0_46, %c0_47], %74 {strides = array<i32>} : memref<2x32xf32, #tpu.memory_space<vmem>>, vector<2x32xf32>,
      %c0_48 = arith.constant 0 : index
      %c0_49 = arith.constant 0 : index
      %c0_50 = arith.constant 0 : index
      %76 = vector.load %arg4[%c0_48, %c0_49, %c0_50] : memref<2x32x32xf32, #tpu.memory_space<vmem>>, vector<2x32x32xf32>
      %c0_51 = arith.constant 0 : index
      %c0_52 = arith.constant 0 : index
      %c0_53 = arith.constant 0 : index
      %77 = vector.load %arg18[%c0_51, %c0_52, %c0_53] : memref<2x32x32xf32, #tpu.memory_space<vmem>>, vector<2x32x32xf32>
      tpu.vector_store %arg18[%c0_51, %c0_52, %c0_53], %76 {strides = array<i32>} : memref<2x32x32xf32, #tpu.memory_space<vmem>>, vector<2x32x32xf32>,
    } else {
    }
    %c0 = arith.constant 0 : index
    %c0_1 = arith.constant 0 : index
    %c0_2 = arith.constant 0 : index
    %3 = vector.load %arg2[%c0, %c0_1, %c0_2] : memref<1x2x16xf32, #tpu.memory_space<vmem>>, vector<1x2x16xf32>
    %4 = vector.shape_cast %3 : vector<1x2x16xf32> to vector<2x16xf32>
    %c0_3 = arith.constant 0 : index
    %c0_4 = arith.constant 0 : index
    %5 = vector.load %arg17[%c0_3, %c0_4] : memref<2x32xf32, #tpu.memory_space<vmem>>, vector<2x32xf32>
    %c0_5 = arith.constant 0 : index
    %c0_6 = arith.constant 0 : index
    %c0_7 = arith.constant 0 : index
    %6 = vector.load %arg18[%c0_5, %c0_6, %c0_7] : memref<2x32x32xf32, #tpu.memory_space<vmem>>, vector<2x32x32xf32>
    %c0_8 = arith.constant 0 : index
    %c0_9 = arith.constant 0 : index
    %7 = memref.load %arg13[%c0_8, %c0_9] : memref<1x2xf32, #tpu.memory_space<smem>>
    %c0_10 = arith.constant 0 : index
    %c1 = arith.constant 1 : index
    %8 = memref.load %arg13[%c0_10, %c1] : memref<1x2xf32, #tpu.memory_space<smem>>
    %c0_11 = arith.constant 0 : index
    %c0_12 = arith.constant 0 : index
    %9 = vector.load %arg6[%c0_11, %c0_12] : memref<32x32xf32, #tpu.memory_space<vmem>>, vector<32x32xf32>
    %cst = arith.constant dense<0.000000e+00> : vector<2x32xf32>
    %10 = tpu.matmul %5, %9, %cst {dimension_numbers = #tpu.dot_dimension_numbers<[1], [0], [0], [1], [0, 0, 1, 1], [], []>} : vector<2x32xf32>, vector<32x32xf32>, vector<2x32xf32> -> vector<2x32xf32>
    %11 = vector.shape_cast %5 : vector<2x32xf32> to vector<2x32x1xf32>
    %c0_13 = arith.constant 0 : index
    %c0_14 = arith.constant 0 : index
    %12 = vector.load %arg7[%c0_13, %c0_14] : memref<32x32xf32, #tpu.memory_space<vmem>>, vector<32x32xf32>
    %13 = vector.shape_cast %12 : vector<32x32xf32> to vector<1x32x32xf32>
    %14 = vector.broadcast %13 : vector<1x32x32xf32> to vector<2x32x32xf32>
    %15 = arith.mulf %14, %6 : vector<2x32x32xf32>
    %16 = vector.broadcast %11 : vector<2x32x1xf32> to vector<2x32x32xf32>
    %17 = arith.mulf %16, %15 : vector<2x32x32xf32>
    %cst_15 = arith.constant dense<0.000000e+00> : vector<2x32xf32>
    %18 = vector.multi_reduction <add>, %17, %cst_15 [1] : vector<2x32x32xf32> to vector<2x32xf32>
    %19 = arith.addf %10, %18 : vector<2x32xf32>
    %c0_16 = arith.constant 0 : index
    %c0_17 = arith.constant 0 : index
    %20 = vector.load %arg5[%c0_16, %c0_17] : memref<16x32xf32, #tpu.memory_space<vmem>>, vector<16x32xf32>
    %cst_18 = arith.constant dense<0.000000e+00> : vector<2x32xf32>
    %21 = tpu.matmul %4, %20, %cst_18 {dimension_numbers = #tpu.dot_dimension_numbers<[1], [0], [0], [1], [0, 0, 1, 1], [], []>} : vector<2x16xf32>, vector<16x32xf32>, vector<2x32xf32> -> vector<2x32xf32>
    %22 = arith.addf %21, %19 : vector<2x32xf32>
    %c0_19 = arith.constant 0 : index
    %c0_20 = arith.constant 0 : index
    %23 = vector.load %arg8[%c0_19, %c0_20] : memref<1x32xf32, #tpu.memory_space<vmem>>, vector<1x32xf32>
    %24 = vector.broadcast %23 : vector<1x32xf32> to vector<2x32xf32>
    %25 = arith.addf %22, %24 : vector<2x32xf32>
    %cst_21 = arith.constant dense<0.000000e+00> : vector<2xf32>
    %26 = vector.multi_reduction <add>, %25, %cst_21 [1] : vector<2x32xf32> to vector<2xf32>
    %27 = vector.shape_cast %26 : vector<2xf32> to vector<2x1xf32>
    %cst_22 = arith.constant 3.200000e+01 : f32
    %28 = vector.broadcast %cst_22 : f32 to vector<2x1xf32>
    %29 = arith.divf %27, %28 : vector<2x1xf32>
    %30 = vector.broadcast %29 : vector<2x1xf32> to vector<2x32xf32>
    %31 = arith.subf %25, %30 : vector<2x32xf32>
    %32 = arith.mulf %31, %31 : vector<2x32xf32>
    %cst_23 = arith.constant dense<0.000000e+00> : vector<2xf32>
    %33 = vector.multi_reduction <add>, %32, %cst_23 [1] : vector<2x32xf32> to vector<2xf32>
    %34 = vector.shape_cast %33 : vector<2xf32> to vector<2x1xf32>
    %cst_24 = arith.constant 3.200000e+01 : f32
    %35 = vector.broadcast %cst_24 : f32 to vector<2x1xf32>
    %36 = arith.divf %34, %35 : vector<2x1xf32>
    %37 = vector.broadcast %29 : vector<2x1xf32> to vector<2x32xf32>
    %38 = arith.subf %25, %37 : vector<2x32xf32>
    %cst_25 = arith.constant 9.99999974E-6 : f32
    %39 = vector.broadcast %cst_25 : f32 to vector<2x1xf32>
    %40 = arith.addf %36, %39 : vector<2x1xf32>
    %41 = math.rsqrt %40 : vector<2x1xf32>
    %42 = vector.broadcast %41 : vector<2x1xf32> to vector<2x32xf32>
    %43 = arith.mulf %38, %42 : vector<2x32xf32>
    %c0_26 = arith.constant 0 : index
    %c0_27 = arith.constant 0 : index
    %44 = vector.load %arg9[%c0_26, %c0_27] : memref<1x32xf32, #tpu.memory_space<vmem>>, vector<1x32xf32>
    %45 = vector.broadcast %44 : vector<1x32xf32> to vector<2x32xf32>
    %46 = arith.mulf %43, %45 : vector<2x32xf32>
    %c0_28 = arith.constant 0 : index
    %c0_29 = arith.constant 0 : index
    %47 = vector.load %arg10[%c0_28, %c0_29] : memref<1x32xf32, #tpu.memory_space<vmem>>, vector<1x32xf32>
    %48 = vector.broadcast %47 : vector<1x32xf32> to vector<2x32xf32>
    %49 = arith.addf %46, %48 : vector<2x32xf32>
    %50 = math.tanh %49 : vector<2x32xf32>
    %51 = vector.broadcast %8 : f32 to vector<2x32x32xf32>
    %52 = arith.mulf %51, %6 : vector<2x32x32xf32>
    %53 = vector.shape_cast %5 : vector<2x32xf32> to vector<2x32x1xf32>
    %54 = vector.shape_cast %50 : vector<2x32xf32> to vector<2x1x32xf32>
    %55 = vector.broadcast %53 : vector<2x32x1xf32> to vector<2x32x32xf32>
    %56 = vector.broadcast %54 : vector<2x1x32xf32> to vector<2x32x32xf32>
    %57 = arith.mulf %55, %56 : vector<2x32x32xf32>
    %58 = vector.broadcast %7 : f32 to vector<2x32x32xf32>
    %59 = arith.mulf %58, %57 : vector<2x32x32xf32>
    %60 = arith.addf %52, %59 : vector<2x32x32xf32>
    %c0_30 = arith.constant 0 : index
    %c0_31 = arith.constant 0 : index
    %61 = vector.load %arg17[%c0_30, %c0_31] : memref<2x32xf32, #tpu.memory_space<vmem>>, vector<2x32xf32>
    tpu.vector_store %arg17[%c0_30, %c0_31], %50 {strides = array<i32>} : memref<2x32xf32, #tpu.memory_space<vmem>>, vector<2x32xf32>,
    %c0_32 = arith.constant 0 : index
    %c0_33 = arith.constant 0 : index
    %c0_34 = arith.constant 0 : index
    %62 = vector.load %arg18[%c0_32, %c0_33, %c0_34] : memref<2x32x32xf32, #tpu.memory_space<vmem>>, vector<2x32x32xf32>
    tpu.vector_store %arg18[%c0_32, %c0_33, %c0_34], %60 {strides = array<i32>} : memref<2x32x32xf32, #tpu.memory_space<vmem>>, vector<2x32x32xf32>,
    %c0_35 = arith.constant 0 : index
    %c0_36 = arith.constant 0 : index
    %63 = vector.load %arg11[%c0_35, %c0_36] : memref<32x128xf32, #tpu.memory_space<vmem>>, vector<32x128xf32>
    %cst_37 = arith.constant dense<0.000000e+00> : vector<2x128xf32>
    %64 = tpu.matmul %50, %63, %cst_37 {dimension_numbers = #tpu.dot_dimension_numbers<[1], [0], [0], [1], [0, 0, 1, 1], [], []>} : vector<2x32xf32>, vector<32x128xf32>, vector<2x128xf32> -> vector<2x128xf32>
    %c0_38 = arith.constant 0 : index
    %c0_39 = arith.constant 0 : index
    %65 = vector.load %arg12[%c0_38, %c0_39] : memref<1x128xf32, #tpu.memory_space<vmem>>, vector<1x128xf32>
    %66 = vector.broadcast %65 : vector<1x128xf32> to vector<2x128xf32>
    %67 = arith.addf %64, %66 : vector<2x128xf32>
    %c0_40 = arith.constant 0 : index
    %c0_41 = arith.constant 0 : index
    %c0_42 = arith.constant 0 : index
    %68 = vector.load %arg16[%c0_40, %c0_41, %c0_42] : memref<1x2x128xf32, #tpu.memory_space<vmem>>, vector<1x2x128xf32>
    %69 = vector.shape_cast %68 : vector<1x2x128xf32> to vector<2x128xf32>
    %70 = vector.shape_cast %67 : vector<2x128xf32> to vector<1x2x128xf32>
    tpu.vector_store %arg16[%c0_40, %c0_41, %c0_42], %70 {strides = array<i32>} : memref<1x2x128xf32, #tpu.memory_space<vmem>>, vector<1x2x128xf32>,
    %c7_i32 = arith.constant 7 : i32
    %71 = arith.cmpi eq, %arg1, %c7_i32 : i32
    %72 = arith.extui %71 : i1 to i32
    %c0_i32_43 = arith.constant 0 : i32
    %73 = arith.cmpi ne, %72, %c0_i32_43 : i32
    scf.if %73 {
      %c0_44 = arith.constant 0 : index
      %c0_45 = arith.constant 0 : index
      %74 = vector.load %arg14[%c0_44, %c0_45] : memref<2x32xf32, #tpu.memory_space<vmem>>, vector<2x32xf32>
      tpu.vector_store %arg14[%c0_44, %c0_45], %50 {strides = array<i32>} : memref<2x32xf32, #tpu.memory_space<vmem>>, vector<2x32xf32>,
      %c0_46 = arith.constant 0 : index
      %c0_47 = arith.constant 0 : index
      %c0_48 = arith.constant 0 : index
      %75 = vector.load %arg15[%c0_46, %c0_47, %c0_48] : memref<2x32x32xf32, #tpu.memory_space<vmem>>, vector<2x32x32xf32>
      tpu.vector_store %arg15[%c0_46, %c0_47, %c0_48], %60 {strides = array<i32>} : memref<2x32x32xf32, #tpu.memory_space<vmem>>, vector<2x32x32xf32>,
    } else {
    }
    return
  }
  func.func @transform_0(%arg0: i32, %arg1: i32) -> (i32, i32, i32) {
    %c0_i32 = arith.constant 0 : i32
    %c0_i32_0 = arith.constant 0 : i32
    return %arg1, %arg0, %c0_i32 : i32, i32, i32
  }
  func.func @transform_1(%arg0: i32, %arg1: i32) -> (i32, i32) {
    %c0_i32 = arith.constant 0 : i32
    %c0_i32_0 = arith.constant 0 : i32
    return %arg0, %c0_i32 : i32, i32
  }
  func.func @transform_2(%arg0: i32, %arg1: i32) -> (i32, i32, i32) {
    %c0_i32 = arith.constant 0 : i32
    %c0_i32_0 = arith.constant 0 : i32
    %c0_i32_1 = arith.constant 0 : i32
    return %arg0, %c0_i32, %c0_i32_0 : i32, i32, i32
  }
  func.func @transform_3(%arg0: i32, %arg1: i32) -> (i32, i32) {
    %c0_i32 = arith.constant 0 : i32
    %c0_i32_0 = arith.constant 0 : i32
    %c0_i32_1 = arith.constant 0 : i32
    return %c0_i32, %c0_i32_0 : i32, i32
  }
  func.func @transform_4(%arg0: i32, %arg1: i32) -> (i32, i32) {
    %c0_i32 = arith.constant 0 : i32
    %c0_i32_0 = arith.constant 0 : i32
    %c0_i32_1 = arith.constant 0 : i32
    return %c0_i32, %c0_i32_0 : i32, i32
  }
  func.func @transform_5(%arg0: i32, %arg1: i32) -> (i32, i32) {
    %c0_i32 = arith.constant 0 : i32
    %c0_i32_0 = arith.constant 0 : i32
    %c0_i32_1 = arith.constant 0 : i32
    return %c0_i32, %c0_i32_0 : i32, i32
  }
  func.func @transform_6(%arg0: i32, %arg1: i32) -> (i32, i32) {
    %c0_i32 = arith.constant 0 : i32
    %c0_i32_0 = arith.constant 0 : i32
    %c0_i32_1 = arith.constant 0 : i32
    return %c0_i32, %c0_i32_0 : i32, i32
  }
  func.func @transform_7(%arg0: i32, %arg1: i32) -> (i32, i32) {
    %c0_i32 = arith.constant 0 : i32
    %c0_i32_0 = arith.constant 0 : i32
    %c0_i32_1 = arith.constant 0 : i32
    return %c0_i32, %c0_i32_0 : i32, i32
  }
  func.func @transform_8(%arg0: i32, %arg1: i32) -> (i32, i32) {
    %c0_i32 = arith.constant 0 : i32
    %c0_i32_0 = arith.constant 0 : i32
    %c0_i32_1 = arith.constant 0 : i32
    return %c0_i32, %c0_i32_0 : i32, i32
  }
  func.func @transform_9(%arg0: i32, %arg1: i32) -> (i32, i32) {
    %c0_i32 = arith.constant 0 : i32
    %c0_i32_0 = arith.constant 0 : i32
    %c0_i32_1 = arith.constant 0 : i32
    return %c0_i32, %c0_i32_0 : i32, i32
  }
  func.func @transform_10(%arg0: i32, %arg1: i32) -> (i32, i32) {
    %c0_i32 = arith.constant 0 : i32
    %c0_i32_0 = arith.constant 0 : i32
    %c0_i32_1 = arith.constant 0 : i32
    return %c0_i32, %c0_i32_0 : i32, i32
  }
  func.func @transform_11(%arg0: i32, %arg1: i32) -> (i32, i32) {
    %c0_i32 = arith.constant 0 : i32
    %c0_i32_0 = arith.constant 0 : i32
    %c0_i32_1 = arith.constant 0 : i32
    return %c0_i32, %c0_i32_0 : i32, i32
  }
  func.func @transform_12(%arg0: i32, %arg1: i32) -> (i32, i32) {
    %c0_i32 = arith.constant 0 : i32
    %c0_i32_0 = arith.constant 0 : i32
    return %arg0, %c0_i32 : i32, i32
  }
  func.func @transform_13(%arg0: i32, %arg1: i32) -> (i32, i32, i32) {
    %c0_i32 = arith.constant 0 : i32
    %c0_i32_0 = arith.constant 0 : i32
    %c0_i32_1 = arith.constant 0 : i32
    return %arg0, %c0_i32, %c0_i32_0 : i32, i32, i32
  }
  func.func @transform_14(%arg0: i32, %arg1: i32) -> (i32, i32, i32) {
    %c0_i32 = arith.constant 0 : i32
    %c0_i32_0 = arith.constant 0 : i32
    return %arg1, %arg0, %c0_i32 : i32, i32, i32
  }
}

</mosaic_0001>

<llo_original>
// kernel: tpu_custom_call.1
$region0: #{tpu_custom_call.1}
  #allocation0 [shape = 'u32[]', space=smem, size = 0x4, offset = 0x4, fixed_abs, tag = 'smem constant byte address 0x4 - core index']
  #allocation1 [shape = 'u32[144,128]{1,0:T(1,128)}', space=vmem, size = 0x12000, scoped, tag = 'internal scratch']
  #allocation2 [shape = 'f32[2,32]{1,0:T(2,128)}', space=vmem, size = 0x400, scoped, tag = 'scratch operand']
  #allocation3 [shape = 'f32[2,32,32]{2,1,0:T(8,128)}', space=vmem, size = 0x8000, scoped, tag = 'scratch operand']
  %s0 = inlined_call_operand.vmem [shape: f32[8,2,16], index: 0, kind: input, shape index: {}]
  %s1 = inlined_call_operand.hbm [shape: f32[2,32], index: 1, kind: input, shape index: {}, may-alias: {1,12}]
  %s2 = inlined_call_operand.hbm [shape: f32[2,32,32], index: 2, kind: input, shape index: {}, may-alias: {2,13}]
  %s3 = inlined_call_operand.vmem [shape: f32[16,32], index: 3, kind: input, shape index: {}]
  %s4 = inlined_call_operand.vmem [shape: f32[32,32], index: 4, kind: input, shape index: {}]
  %s5 = inlined_call_operand.vmem [shape: f32[32,32], index: 5, kind: input, shape index: {}]
  %s6 = inlined_call_operand.vmem [shape: f32[1,32], index: 6, kind: input, shape index: {}]
  %s7 = inlined_call_operand.vmem [shape: f32[1,32], index: 7, kind: input, shape index: {}]
  %s8 = inlined_call_operand.vmem [shape: f32[1,32], index: 8, kind: input, shape index: {}]
  %s9 = inlined_call_operand.vmem [shape: f32[32,128], index: 9, kind: input, shape index: {}]
  %s10 = inlined_call_operand.vmem [shape: f32[1,128], index: 10, kind: input, shape index: {}]
  %s11 = inlined_call_operand.hbm [shape: f32[1,2], index: 11, kind: input, shape index: {}]
  %s12 = inlined_call_operand.hbm [shape: f32[2,32], index: 12, kind: output, shape index: {0}, may-alias: {1,12}]
  %s13 = inlined_call_operand.hbm [shape: f32[2,32,32], index: 13, kind: output, shape index: {1}, may-alias: {2,13}]
  %s14 = inlined_call_operand.hbm [shape: f32[8,2,128], index: 14, kind: output, shape index: {2}]
  %15 = xla_tuple %s12, %s13, %s14
  %s16 = sld [smem:[#allocation0]]
  $region117: #{tpu_custom_call.1} parent=0
    _
  %s18 = ssub.s32 1, %s16
  %s19 = scalar_select 0, %s18, %s16
  $region1: #{tpu_custom_call.1} parent=0
    #allocation4 [shape = 'u8[1024]{0}', space=vmem, size = 0x400, scoped, tag = 'input window, operand 1, single buffered']
    #allocation5 [shape = 's32[2]{0}', space=sflag, size = 0x8, scoped, tag = 'scoped memory for tpu_custom_call.1']
    #allocation6 [shape = 's32[2]{0}', space=sflag, size = 0x8, scoped, tag = 'scoped memory for tpu_custom_call.1']
    #allocation7 [shape = 's32[2]{0}', space=sflag, size = 0x8, scoped, tag = 'scoped memory for tpu_custom_call.1']
    #allocation8 [shape = 'u8[32768]{0}', space=vmem, size = 0x8000, scoped, tag = 'input window, operand 2, single buffered']
    #allocation9 [shape = 's32[1]{0}', space=sflag, size = 0x4, scoped, tag = 'scoped memory for tpu_custom_call.1']
    #allocation10 [shape = 'u8[512]{0}', space=smem, size = 0x200, scoped, tag = 'input window, operand 11, single buffered']
    #allocation11 [shape = 'u8[1024]{0}', space=vmem, size = 0x400, scoped, tag = 'output window, operand 0, single buffered']
    #allocation12 [shape = 'u8[32768]{0}', space=vmem, size = 0x8000, scoped, tag = 'output window, operand 1, single buffered']
    #allocation13 [shape = 's32[1]{0}', space=sflag, size = 0x4, scoped, tag = 'scoped memory for tpu_custom_call.1']
    #allocation14 [shape = 'u8[2048]{0}', space=vmem, size = 0x800, scoped, tag = 'output window, operand 2']
    %20 = vsyncpa [#allocation5], 0
    %21 = vsyncpa [#allocation9], 0
    %22 = vsyncpa [#allocation7], 0
    %23 = vsyncpa [#allocation6], 0
    %24 = vsyncpa [#allocation13], 0
    loop: start=0, step=1, limit=10
    $region2: #{tpu_custom_call.1} parent=1 // loop_pre_header
      _
    $region3: #{tpu_custom_call.1} parent=1 // loop_header
      %s26 = sphi 0, %s30
      %p27 = scmp.ge.s32.totalorder %s26, 10
      %s33 = sphi 0, %s45
      %s34 = sphi 0, %s41
      %s35 = sphi 0, %s33
      %s36 = sphi 0, %s34
      %s37 = sphi 0, %s35
      %s38 = sphi 0, %s36
      %s50 = sphi 0, %s52
      %s53 = sphi 0, %s50
      %s54 = sphi 0, %s53
      %s70 = sphi 0, %s54
      %s76 = sphi 0, %s78
      %s79 = sphi 0, %s76
      %s80 = sphi 0, %s79
      %s96 = sphi 0, %s80
      %s102 = sphi 0, %s104
      %s105 = sphi 0, %s102
      %s106 = sphi 0, %s105
      %s122 = sphi 0, %s106
      %s126 = sphi 0, %s126
      %s128 = sphi 0, %s126
      %s129 = sphi 0, %s128
      %s143 = sphi 0, %s129
      %s147 = sphi 0, %s147
      %s149 = sphi 0, %s147
      %s150 = sphi 0, %s149
      %s164 = sphi 0, %s150
      %s168 = sphi 0, %s168
      %s170 = sphi 0, %s168
      %s171 = sphi 0, %s170
      %s185 = sphi 0, %s171
      %s189 = sphi 0, %s189
      %s191 = sphi 0, %s189
      %s192 = sphi 0, %s191
      %s206 = sphi 0, %s192
      %s210 = sphi 0, %s210
      %s212 = sphi 0, %s210
      %s213 = sphi 0, %s212
      %s227 = sphi 0, %s213
      %s231 = sphi 0, %s231
      %s233 = sphi 0, %s231
      %s234 = sphi 0, %s233
      %s248 = sphi 0, %s234
      %s252 = sphi 0, %s252
      %s254 = sphi 0, %s252
      %s255 = sphi 0, %s254
      %s269 = sphi 0, %s255
      %s273 = sphi 0, %s273
      %s275 = sphi 0, %s273
      %s276 = sphi 0, %s275
      %s290 = sphi 0, %s276
      %s294 = sphi 0, %s294
      %s296 = sphi 0, %s294
      %s297 = sphi 0, %s296
      %s311 = sphi 0, %s297
      %s317 = sphi 0, %s319
      %s320 = sphi 0, %s317
      %s321 = sphi 0, %s320
      %s337 = sphi 0, %s321
      %s343 = sphi 0, %s345
      %s346 = sphi 0, %s343
      %s347 = sphi 0, %s346
      %s363 = sphi 0, %s347
      %s371 = sphi 0, %s373
      %s374 = sphi 0, %s371
      %s375 = sphi 0, %s374
      %s391 = sphi 0, %s375
    $region4: #{tpu_custom_call.1} parent=1 // loop_header_branch
      %29 = sbr.rel (%p27) target = $region8
    $region5: #{tpu_custom_call.1} parent=1 // loop_body
      %s31 = ssub.s32 %s26, 1
      %s32 = ssub.s32 %s26, 2
      %s39 = sadd.s32 1, %s34
      %p40 = scmp.ge.s32.totalorder %s39, 8
      %s41 = scalar_select %p40, 0, %s39
      %s42 = sadd.s32 1, %s33
      %s43 = scalar_select %p40, %s42, %s33
      %p44 = scmp.ge.s32.totalorder %s43, 1
      %s45 = scalar_select %p44, 0, %s43
      %s46 = ssub.s32 %s34, %s41
      %s47 = ssub.s32 %s33, %s45
      %s48 = sor.u32 %s46, %s47
      %p49 = scmp.eq.s32.totalorder %s48, 0
      %s51 = sadd.s32 %s50, 1
      %s52 = scalar_select %p49, %s50, %s51
      %p55 = pneg %p49
      %p56 = scmp.eq.s32.totalorder %s26, 7
      %p57 = por %p55, %p56
      %p58 = scmp.ne.s32.totalorder %s50, %s53
      %p59 = scmp.eq.s32.totalorder %s26, 0
      %p60 = por %p58, %p59
      %p61 = scmp.ne.s32.totalorder %s50, %s53
      %p62 = scmp.eq.s32.totalorder %s31, 7
      %p63 = por %p61, %p62
      %p64 = scmp.ne.s32.totalorder %s53, %s54
      %p65 = scmp.eq.s32.totalorder %s31, 0
      %p66 = por %p64, %p65
      %p67 = scmp.ne.s32.totalorder %s53, %s54
      %p68 = scmp.eq.s32.totalorder %s32, 7
      %p69 = por %p67, %p68
      %p71 = scmp.ne.s32.totalorder %s54, %s70
      %p72 = scmp.eq.s32.totalorder %s32, 0
      %p73 = por %p71, %p72
      %s74 = ssub.s32 %s33, %s45
      %p75 = scmp.eq.s32.totalorder %s74, 0
      %s77 = sadd.s32 %s76, 1
      %s78 = scalar_select %p75, %s76, %s77
      %p81 = pneg %p75
      %p82 = scmp.eq.s32.totalorder %s26, 7
      %p83 = por %p81, %p82
      %p84 = scmp.ne.s32.totalorder %s76, %s79
      %p85 = scmp.eq.s32.totalorder %s26, 0
      %p86 = por %p84, %p85
      %p87 = scmp.ne.s32.totalorder %s76, %s79
      %p88 = scmp.eq.s32.totalorder %s31, 7
      %p89 = por %p87, %p88
      %p90 = scmp.ne.s32.totalorder %s79, %s80
      %p91 = scmp.eq.s32.totalorder %s31, 0
      %p92 = por %p90, %p91
      %p93 = scmp.ne.s32.totalorder %s79, %s80
      %p94 = scmp.eq.s32.totalorder %s32, 7
      %p95 = por %p93, %p94
      %p97 = scmp.ne.s32.totalorder %s80, %s96
      %p98 = scmp.eq.s32.totalorder %s32, 0
      %p99 = por %p97, %p98
      %s100 = ssub.s32 %s33, %s45
      %p101 = scmp.eq.s32.totalorder %s100, 0
      %s103 = sadd.s32 %s102, 1
      %s104 = scalar_select %p101, %s102, %s103
      %p107 = pneg %p101
      %p108 = scmp.eq.s32.totalorder %s26, 7
      %p109 = por %p107, %p108
      %p110 = scmp.ne.s32.totalorder %s102, %s105
      %p111 = scmp.eq.s32.totalorder %s26, 0
      %p112 = por %p110, %p111
      %p113 = scmp.ne.s32.totalorder %s102, %s105
      %p114 = scmp.eq.s32.totalorder %s31, 7
      %p115 = por %p113, %p114
      %p116 = scmp.ne.s32.totalorder %s105, %s106
      %p117 = scmp.eq.s32.totalorder %s31, 0
      %p118 = por %p116, %p117
      %p119 = scmp.ne.s32.totalorder %s105, %s106
      %p120 = scmp.eq.s32.totalorder %s32, 7
      %p121 = por %p119, %p120
      %p123 = scmp.ne.s32.totalorder %s106, %s122
      %p124 = scmp.eq.s32.totalorder %s32, 0
      %p125 = por %p123, %p124
      %s127 = sadd.s32 %s126, 1
      %p130 = scmp.eq.s32.totalorder %s26, 7
      %p131 = scmp.ne.s32.totalorder %s126, %s128
      %p132 = scmp.eq.s32.totalorder %s26, 0
      %p133 = por %p131, %p132
      %p134 = scmp.ne.s32.totalorder %s126, %s128
      %p135 = scmp.eq.s32.totalorder %s31, 7
      %p136 = por %p134, %p135
      %p137 = scmp.ne.s32.totalorder %s128, %s129
      %p138 = scmp.eq.s32.totalorder %s31, 0
      %p139 = por %p137, %p138
      %p140 = scmp.ne.s32.totalorder %s128, %s129
      %p141 = scmp.eq.s32.totalorder %s32, 7
      %p142 = por %p140, %p141
      %p144 = scmp.ne.s32.totalorder %s129, %s143
      %p145 = scmp.eq.s32.totalorder %s32, 0
      %p146 = por %p144, %p145
      %s148 = sadd.s32 %s147, 1
      %p151 = scmp.eq.s32.totalorder %s26, 7
      %p152 = scmp.ne.s32.totalorder %s147, %s149
      %p153 = scmp.eq.s32.totalorder %s26, 0
      %p154 = por %p152, %p153
      %p155 = scmp.ne.s32.totalorder %s147, %s149
      %p156 = scmp.eq.s32.totalorder %s31, 7
      %p157 = por %p155, %p156
      %p158 = scmp.ne.s32.totalorder %s149, %s150
      %p159 = scmp.eq.s32.totalorder %s31, 0
      %p160 = por %p158, %p159
      %p161 = scmp.ne.s32.totalorder %s149, %s150
      %p162 = scmp.eq.s32.totalorder %s32, 7
      %p163 = por %p161, %p162
      %p165 = scmp.ne.s32.totalorder %s150, %s164
      %p166 = scmp.eq.s32.totalorder %s32, 0
      %p167 = por %p165, %p166
      %s169 = sadd.s32 %s168, 1
      %p172 = scmp.eq.s32.totalorder %s26, 7
      %p173 = scmp.ne.s32.totalorder %s168, %s170
      %p174 = scmp.eq.s32.totalorder %s26, 0
      %p175 = por %p173, %p174
      %p176 = scmp.ne.s32.totalorder %s168, %s170
      %p177 = scmp.eq.s32.totalorder %s31, 7
      %p178 = por %p176, %p177
      %p179 = scmp.ne.s32.totalorder %s170, %s171
      %p180 = scmp.eq.s32.totalorder %s31, 0
      %p181 = por %p179, %p180
      %p182 = scmp.ne.s32.totalorder %s170, %s171
      %p183 = scmp.eq.s32.totalorder %s32, 7
      %p184 = por %p182, %p183
      %p186 = scmp.ne.s32.totalorder %s171, %s185
      %p187 = scmp.eq.s32.totalorder %s32, 0
      %p188 = por %p186, %p187
      %s190 = sadd.s32 %s189, 1
      %p193 = scmp.eq.s32.totalorder %s26, 7
      %p194 = scmp.ne.s32.totalorder %s189, %s191
      %p195 = scmp.eq.s32.totalorder %s26, 0
      %p196 = por %p194, %p195
      %p197 = scmp.ne.s32.totalorder %s189, %s191
      %p198 = scmp.eq.s32.totalorder %s31, 7
      %p199 = por %p197, %p198
      %p200 = scmp.ne.s32.totalorder %s191, %s192
      %p201 = scmp.eq.s32.totalorder %s31, 0
      %p202 = por %p200, %p201
      %p203 = scmp.ne.s32.totalorder %s191, %s192
      %p204 = scmp.eq.s32.totalorder %s32, 7
      %p205 = por %p203, %p204
      %p207 = scmp.ne.s32.totalorder %s192, %s206
      %p208 = scmp.eq.s32.totalorder %s32, 0
      %p209 = por %p207, %p208
      %s211 = sadd.s32 %s210, 1
      %p214 = scmp.eq.s32.totalorder %s26, 7
      %p215 = scmp.ne.s32.totalorder %s210, %s212
      %p216 = scmp.eq.s32.totalorder %s26, 0
      %p217 = por %p215, %p216
      %p218 = scmp.ne.s32.totalorder %s210, %s212
      %p219 = scmp.eq.s32.totalorder %s31, 7
      %p220 = por %p218, %p219
      %p221 = scmp.ne.s32.totalorder %s212, %s213
      %p222 = scmp.eq.s32.totalorder %s31, 0
      %p223 = por %p221, %p222
      %p224 = scmp.ne.s32.totalorder %s212, %s213
      %p225 = scmp.eq.s32.totalorder %s32, 7
      %p226 = por %p224, %p225
      %p228 = scmp.ne.s32.totalorder %s213, %s227
      %p229 = scmp.eq.s32.totalorder %s32, 0
      %p230 = por %p228, %p229
      %s232 = sadd.s32 %s231, 1
      %p235 = scmp.eq.s32.totalorder %s26, 7
      %p236 = scmp.ne.s32.totalorder %s231, %s233
      %p237 = scmp.eq.s32.totalorder %s26, 0
      %p238 = por %p236, %p237
      %p239 = scmp.ne.s32.totalorder %s231, %s233
      %p240 = scmp.eq.s32.totalorder %s31, 7
      %p241 = por %p239, %p240
      %p242 = scmp.ne.s32.totalorder %s233, %s234
      %p243 = scmp.eq.s32.totalorder %s31, 0
      %p244 = por %p242, %p243
      %p245 = scmp.ne.s32.totalorder %s233, %s234
      %p246 = scmp.eq.s32.totalorder %s32, 7
      %p247 = por %p245, %p246
      %p249 = scmp.ne.s32.totalorder %s234, %s248
      %p250 = scmp.eq.s32.totalorder %s32, 0
      %p251 = por %p249, %p250
      %s253 = sadd.s32 %s252, 1
      %p256 = scmp.eq.s32.totalorder %s26, 7
      %p257 = scmp.ne.s32.totalorder %s252, %s254
      %p258 = scmp.eq.s32.totalorder %s26, 0
      %p259 = por %p257, %p258
      %p260 = scmp.ne.s32.totalorder %s252, %s254
      %p261 = scmp.eq.s32.totalorder %s31, 7
      %p262 = por %p260, %p261
      %p263 = scmp.ne.s32.totalorder %s254, %s255
      %p264 = scmp.eq.s32.totalorder %s31, 0
      %p265 = por %p263, %p264
      %p266 = scmp.ne.s32.totalorder %s254, %s255
      %p267 = scmp.eq.s32.totalorder %s32, 7
      %p268 = por %p266, %p267
      %p270 = scmp.ne.s32.totalorder %s255, %s269
      %p271 = scmp.eq.s32.totalorder %s32, 0
      %p272 = por %p270, %p271
      %s274 = sadd.s32 %s273, 1
      %p277 = scmp.eq.s32.totalorder %s26, 7
      %p278 = scmp.ne.s32.totalorder %s273, %s275
      %p279 = scmp.eq.s32.totalorder %s26, 0
      %p280 = por %p278, %p279
      %p281 = scmp.ne.s32.totalorder %s273, %s275
      %p282 = scmp.eq.s32.totalorder %s31, 7
      %p283 = por %p281, %p282
      %p284 = scmp.ne.s32.totalorder %s275, %s276
      %p285 = scmp.eq.s32.totalorder %s31, 0
      %p286 = por %p284, %p285
      %p287 = scmp.ne.s32.totalorder %s275, %s276
      %p288 = scmp.eq.s32.totalorder %s32, 7
      %p289 = por %p287, %p288
      %p291 = scmp.ne.s32.totalorder %s276, %s290
      %p292 = scmp.eq.s32.totalorder %s32, 0
      %p293 = por %p291, %p292
      %s295 = sadd.s32 %s294, 1
      %p298 = scmp.eq.s32.totalorder %s26, 7
      %p299 = scmp.ne.s32.totalorder %s294, %s296
      %p300 = scmp.eq.s32.totalorder %s26, 0
      %p301 = por %p299, %p300
      %p302 = scmp.ne.s32.totalorder %s294, %s296
      %p303 = scmp.eq.s32.totalorder %s31, 7
      %p304 = por %p302, %p303
      %p305 = scmp.ne.s32.totalorder %s296, %s297
      %p306 = scmp.eq.s32.totalorder %s31, 0
      %p307 = por %p305, %p306
      %p308 = scmp.ne.s32.totalorder %s296, %s297
      %p309 = scmp.eq.s32.totalorder %s32, 7
      %p310 = por %p308, %p309
      %p312 = scmp.ne.s32.totalorder %s297, %s311
      %p313 = scmp.eq.s32.totalorder %s32, 0
      %p314 = por %p312, %p313
      %s315 = ssub.s32 %s33, %s45
      %p316 = scmp.eq.s32.totalorder %s315, 0
      %s318 = sadd.s32 %s317, 1
      %s319 = scalar_select %p316, %s317, %s318
      %p322 = pneg %p316
      %p323 = scmp.eq.s32.totalorder %s26, 7
      %p324 = por %p322, %p323
      %p325 = scmp.ne.s32.totalorder %s317, %s320
      %p326 = scmp.eq.s32.totalorder %s26, 0
      %p327 = por %p325, %p326
      %p328 = scmp.ne.s32.totalorder %s317, %s320
      %p329 = scmp.eq.s32.totalorder %s31, 7
      %p330 = por %p328, %p329
      %p331 = scmp.ne.s32.totalorder %s320, %s321
      %p332 = scmp.eq.s32.totalorder %s31, 0
      %p333 = por %p331, %p332
      %p334 = scmp.ne.s32.totalorder %s320, %s321
      %p335 = scmp.eq.s32.totalorder %s32, 7
      %p336 = por %p334, %p335
      %p338 = scmp.ne.s32.totalorder %s321, %s337
      %p339 = scmp.eq.s32.totalorder %s32, 0
      %p340 = por %p338, %p339
      %s341 = ssub.s32 %s33, %s45
      %p342 = scmp.eq.s32.totalorder %s341, 0
      %s344 = sadd.s32 %s343, 1
      %s345 = scalar_select %p342, %s343, %s344
      %p348 = pneg %p342
      %p349 = scmp.eq.s32.totalorder %s26, 7
      %p350 = por %p348, %p349
      %p351 = scmp.ne.s32.totalorder %s343, %s346
      %p352 = scmp.eq.s32.totalorder %s26, 0
      %p353 = por %p351, %p352
      %p354 = scmp.ne.s32.totalorder %s343, %s346
      %p355 = scmp.eq.s32.totalorder %s31, 7
      %p356 = por %p354, %p355
      %p357 = scmp.ne.s32.totalorder %s346, %s347
      %p358 = scmp.eq.s32.totalorder %s31, 0
      %p359 = por %p357, %p358
      %p360 = scmp.ne.s32.totalorder %s346, %s347
      %p361 = scmp.eq.s32.totalorder %s32, 7
      %p362 = por %p360, %p361
      %p364 = scmp.ne.s32.totalorder %s347, %s363
      %p365 = scmp.eq.s32.totalorder %s32, 0
      %p366 = por %p364, %p365
      %s367 = ssub.s32 %s34, %s41
      %s368 = ssub.s32 %s33, %s45
      %s369 = sor.u32 %s367, %s368
      %p370 = scmp.eq.s32.totalorder %s369, 0
      %s372 = sadd.s32 %s371, 1
      %s373 = scalar_select %p370, %s371, %s372
      %p376 = pneg %p370
      %p377 = scmp.eq.s32.totalorder %s26, 7
      %p378 = por %p376, %p377
      %p379 = scmp.ne.s32.totalorder %s371, %s374
      %p380 = scmp.eq.s32.totalorder %s26, 0
      %p381 = por %p379, %p380
      %p382 = scmp.ne.s32.totalorder %s371, %s374
      %p383 = scmp.eq.s32.totalorder %s31, 7
      %p384 = por %p382, %p383
      %p385 = scmp.ne.s32.totalorder %s374, %s375
      %p386 = scmp.eq.s32.totalorder %s31, 0
      %p387 = por %p385, %p386
      %p388 = scmp.ne.s32.totalorder %s374, %s375
      %p389 = scmp.eq.s32.totalorder %s32, 7
      %p390 = por %p388, %p389
      %p392 = scmp.ne.s32.totalorder %s375, %s391
      %p393 = scmp.eq.s32.totalorder %s32, 0
      %p394 = por %p392, %p393
      %p395 = scmp.le.s32.totalorder 1, %s26
      %p396 = scmp.lt.s32.totalorder %s26, 9
      %p397 = pnand %p395, %p396
      %p398 = pneg %p397
      // Predicated region
      $region9: #{tpu_custom_call.1} parent=5 // pred_check
        _
      $region10: #{tpu_custom_call.1} parent=5 // pred_check_branch
        %400 = sbr.rel (%p397) target = $region12
      $region11: #{tpu_custom_call.1} parent=5 // pred_region
        %s401 = ssub.s32 %s26, 1
        // Predicated region
        $region13: #{tpu_custom_call.1} parent=11 // pred_check
          %p402 = pneg %p92
        $region14: #{tpu_custom_call.1} parent=11 // pred_check_branch
          %404 = sbr.rel (%p402) target = $region16
        $region15: #{tpu_custom_call.1} parent=11 // pred_region
          %s406 = ssub.s32 32, 32
          %407 = vsyncadd [#allocation5], %s406
          %s408 = smul.addr %s35, 32
          %s409 = scalar_lea.hbm %s1, %s408
          %s411 = sshll.u32 [#allocation4], 4
          %s412 = int_to_ptr.vmem [resolvable:$true] %s411
          %414 = dma.hbm_to_vmem [thread:$0]  %s409, 32, %s412, [#allocation5]
        $region16: #{tpu_custom_call.1} parent=11 // pred_fallthru
          _
        // Predicated region
        $region17: #{tpu_custom_call.1} parent=11 // pred_check
          %p415 = pneg %p118
        $region18: #{tpu_custom_call.1} parent=11 // pred_check_branch
          %417 = sbr.rel (%p415) target = $region20
        $region19: #{tpu_custom_call.1} parent=11 // pred_region
          %s418 = smul.u32 2, %s35
          %s420 = ssub.s32 1024, 1024
          %421 = vsyncadd [#allocation9], %s420
          %s422 = smul.addr %s418, 4
          %s423 = smul.addr %s422, 128
          %s424 = scalar_lea.hbm %s2, %s423
          %s425 = sshll.u32 [#allocation8], 4
          %s426 = int_to_ptr.vmem [resolvable:$true] %s425
          %431 = dma.hbm_to_vmem [thread:$0]  %s424, 1024, %s426, [#allocation9], 128, 128, 8
        $region20: #{tpu_custom_call.1} parent=11 // pred_fallthru
          _
        // Predicated region
        $region21: #{tpu_custom_call.1} parent=11 // pred_check
          %p432 = pneg %p139
        $region22: #{tpu_custom_call.1} parent=11 // pred_check_branch
          %434 = sbr.rel (%p432) target = $region24
        $region23: #{tpu_custom_call.1} parent=11 // pred_region
          _
        $region24: #{tpu_custom_call.1} parent=11 // pred_fallthru
          _
        // Predicated region
        $region25: #{tpu_custom_call.1} parent=11 // pred_check
          %p435 = pneg %p160
        $region26: #{tpu_custom_call.1} parent=11 // pred_check_branch
          %437 = sbr.rel (%p435) target = $region28
        $region27: #{tpu_custom_call.1} parent=11 // pred_region
          _
        $region28: #{tpu_custom_call.1} parent=11 // pred_fallthru
          _
        // Predicated region
        $region29: #{tpu_custom_call.1} parent=11 // pred_check
          %p438 = pneg %p181
        $region30: #{tpu_custom_call.1} parent=11 // pred_check_branch
          %440 = sbr.rel (%p438) target = $region32
        $region31: #{tpu_custom_call.1} parent=11 // pred_region
          _
        $region32: #{tpu_custom_call.1} parent=11 // pred_fallthru
          _
        // Predicated region
        $region33: #{tpu_custom_call.1} parent=11 // pred_check
          %p441 = pneg %p202
        $region34: #{tpu_custom_call.1} parent=11 // pred_check_branch
          %443 = sbr.rel (%p441) target = $region36
        $region35: #{tpu_custom_call.1} parent=11 // pred_region
          _
        $region36: #{tpu_custom_call.1} parent=11 // pred_fallthru
          _
        // Predicated region
        $region37: #{tpu_custom_call.1} parent=11 // pred_check
          %p444 = pneg %p223
        $region38: #{tpu_custom_call.1} parent=11 // pred_check_branch
          %446 = sbr.rel (%p444) target = $region40
        $region39: #{tpu_custom_call.1} parent=11 // pred_region
          _
        $region40: #{tpu_custom_call.1} parent=11 // pred_fallthru
          _
        // Predicated region
        $region41: #{tpu_custom_call.1} parent=11 // pred_check
          %p447 = pneg %p244
        $region42: #{tpu_custom_call.1} parent=11 // pred_check_branch
          %449 = sbr.rel (%p447) target = $region44
        $region43: #{tpu_custom_call.1} parent=11 // pred_region
          _
        $region44: #{tpu_custom_call.1} parent=11 // pred_fallthru
          _
        // Predicated region
        $region45: #{tpu_custom_call.1} parent=11 // pred_check
          %p450 = pneg %p265
        $region46: #{tpu_custom_call.1} parent=11 // pred_check_branch
          %452 = sbr.rel (%p450) target = $region48
        $region47: #{tpu_custom_call.1} parent=11 // pred_region
          _
        $region48: #{tpu_custom_call.1} parent=11 // pred_fallthru
          _
        // Predicated region
        $region49: #{tpu_custom_call.1} parent=11 // pred_check
          %p453 = pneg %p286
        $region50: #{tpu_custom_call.1} parent=11 // pred_check_branch
          %455 = sbr.rel (%p453) target = $region52
        $region51: #{tpu_custom_call.1} parent=11 // pred_region
          _
        $region52: #{tpu_custom_call.1} parent=11 // pred_fallthru
          _
        // Predicated region
        $region53: #{tpu_custom_call.1} parent=11 // pred_check
          %p456 = pneg %p307
        $region54: #{tpu_custom_call.1} parent=11 // pred_check_branch
          %458 = sbr.rel (%p456) target = $region56
        $region55: #{tpu_custom_call.1} parent=11 // pred_region
          %s460 = ssub.s32 16, 16
          %461 = vsyncadd [#allocation7], %s460
          %464 = dma.hbm_to_smem %s11, 16, [#allocation10], [#allocation7]
        $region56: #{tpu_custom_call.1} parent=11 // pred_fallthru
          _
      $region12: #{tpu_custom_call.1} parent=5 // pred_fallthru
        _
      %p465 = scmp.lt.s32.totalorder %s26, 8
      // Predicated region
      $region57: #{tpu_custom_call.1} parent=5 // pred_check
        %p466 = pneg %p465
      $region58: #{tpu_custom_call.1} parent=5 // pred_check_branch
        %468 = sbr.rel (%p466) target = $region60
      $region59: #{tpu_custom_call.1} parent=5 // pred_region
        // Predicated region
        $region61: #{tpu_custom_call.1} parent=59 // pred_check
          %p469 = pneg %p60
        $region62: #{tpu_custom_call.1} parent=59 // pred_check_branch
          %471 = sbr.rel (%p469) target = $region64
        $region63: #{tpu_custom_call.1} parent=59 // pred_region
          %p472 = scmp.lt.s32.totalorder %s34, 7
          %s473 = scalar_select %p472, %s34, 7
          %p474 = scmp.lt.s32.totalorder %s33, 0
          %s475 = scalar_select %p474, %s33, 0
          %s476 = sadd.s32 %s475, %s473
          %s477 = smul.addr %s476, 2
          %s478 = scalar_lea.vmem %s0, %s477
        $region64: #{tpu_custom_call.1} parent=59 // pred_fallthru
          _
      $region60: #{tpu_custom_call.1} parent=5 // pred_fallthru
        _
      %p479 = scmp.le.s32.totalorder 1, %s26
      %p480 = scmp.lt.s32.totalorder %s26, 9
      %p481 = pnand %p479, %p480
      %p482 = pneg %p481
      // Predicated region
      $region65: #{tpu_custom_call.1} parent=5 // pred_check
        _
      $region66: #{tpu_custom_call.1} parent=5 // pred_check_branch
        %484 = sbr.rel (%p481) target = $region68
      $region67: #{tpu_custom_call.1} parent=5 // pred_region
        %s485 = ssub.s32 %s26, 1
        // Predicated region
        $region69: #{tpu_custom_call.1} parent=67 // pred_check
          %p486 = pneg %p92
        $region70: #{tpu_custom_call.1} parent=67 // pred_check_branch
          %488 = sbr.rel (%p486) target = $region72
        $region71: #{tpu_custom_call.1} parent=67 // pred_region
          %489 = dma.done [#allocation5], 32
        $region72: #{tpu_custom_call.1} parent=67 // pred_fallthru
          _
        // Predicated region
        $region73: #{tpu_custom_call.1} parent=67 // pred_check
          %p490 = pneg %p118
        $region74: #{tpu_custom_call.1} parent=67 // pred_check_branch
          %492 = sbr.rel (%p490) target = $region76
        $region75: #{tpu_custom_call.1} parent=67 // pred_region
          %493 = dma.done [#allocation9], 1024
        $region76: #{tpu_custom_call.1} parent=67 // pred_fallthru
          _
        // Predicated region
        $region77: #{tpu_custom_call.1} parent=67 // pred_check
          %p494 = pneg %p307
        $region78: #{tpu_custom_call.1} parent=67 // pred_check_branch
          %496 = sbr.rel (%p494) target = $region80
        $region79: #{tpu_custom_call.1} parent=67 // pred_region
          %497 = dma.done [#allocation7], 16
        $region80: #{tpu_custom_call.1} parent=67 // pred_fallthru
          _
        %498 = sfence
        %p499 = scmp.lt.s32.totalorder %s36, 7
        %s500 = scalar_select %p499, %s36, 7
        %p501 = scmp.lt.s32.totalorder %s35, 0
        %s502 = scalar_select %p501, %s35, 0
        %s503 = sadd.s32 %s502, %s500
        %s504 = smul.addr %s503, 2
        %s505 = scalar_lea.vmem %s0, %s504
        %p506 = pneg %p66
        %p507 = pneg %p63
        %p508 = pneg %p92
        %p509 = pneg %p89
        %p510 = pneg %p118
        %p511 = pneg %p115
        %p512 = pneg %p139
        %p513 = pneg %p136
        %p514 = pneg %p160
        %p515 = pneg %p157
        %p516 = pneg %p181
        %p517 = pneg %p178
        %p518 = pneg %p202
        %p519 = pneg %p199
        %p520 = pneg %p223
        %p521 = pneg %p220
        %p522 = pneg %p244
        %p523 = pneg %p241
        %p524 = pneg %p265
        %p525 = pneg %p262
        %p526 = pneg %p286
        %p527 = pneg %p283
        %p528 = pneg %p307
        %p529 = pneg %p304
        %p530 = pneg %p333
        %p531 = pneg %p330
        %p532 = pneg %p359
        %p533 = pneg %p356
        %p534 = pneg %p387
        %p535 = pneg %p384
        %s536 = sand.u32 %s31, 1
        %s537 = scalar_lea.sflag [#allocation6], %s536
        %s538 = sand.u32 %s374, 1
        %s539 = smul.addr %s538, 2
        %s540 = scalar_lea.vmem [#allocation14], %s539
        %p541 = scmp.lt.s32.totalorder %s36, 7
        %s542 = scalar_select %p541, %s36, 7
        %p543 = scmp.lt.s32.totalorder %s35, 0
        %s544 = scalar_select %p543, %s35, 0
        %s545 = sadd.s32 %s544, %s542
        %s546 = smul.addr %s545, 2
        %s547 = scalar_lea.vmem %s0, %s546
        %s548 = smul.u32 2, %s35
        %s549 = smul.u32 2, %s35
        %p550 = scmp.eq.s32.totalorder %s36, 0
        // Predicated region
        $region81: #{tpu_custom_call.1} parent=67 // pred_check
          %p551 = pneg %p550
        $region82: #{tpu_custom_call.1} parent=67 // pred_check_branch
          %553 = sbr.rel (%p551) target = $region84
        $region83: #{tpu_custom_call.1} parent=67 // pred_region
          %v554 = vld [vmem:[#allocation4] sm:$0x3]
          %vm555 = vcmask 254976
          %556 = vst.msk [vmem:[#allocation2] sm:$0x3] %vm555, %v554
          %v557 = vld [vmem:[#allocation8] sm:$0xff]
          %v558 = vld [vmem:[#allocation8 + $0x8] sm:$0xff]
          %v559 = vld [vmem:[#allocation8 + $0x10] sm:$0xff]
          %v560 = vld [vmem:[#allocation8 + $0x18] sm:$0xff]
          %v561 = vld [vmem:[#allocation8 + $0x20] sm:$0xff]
          %v562 = vld [vmem:[#allocation8 + $0x28] sm:$0xff]
          %v563 = vld [vmem:[#allocation8 + $0x30] sm:$0xff]
          %v564 = vld [vmem:[#allocation8 + $0x38] sm:$0xff]
          %vm565 = vcmask 261120
          %566 = vst.msk [vmem:[#allocation3] sm:$0xff] %vm565, %v557
          %567 = vst.msk [vmem:[#allocation3 + $0x8] sm:$0xff] %vm565, %v558
          %568 = vst.msk [vmem:[#allocation3 + $0x10] sm:$0xff] %vm565, %v559
          %569 = vst.msk [vmem:[#allocation3 + $0x18] sm:$0xff] %vm565, %v560
          %570 = vst.msk [vmem:[#allocation3 + $0x20] sm:$0xff] %vm565, %v561
          %571 = vst.msk [vmem:[#allocation3 + $0x28] sm:$0xff] %vm565, %v562
          %572 = vst.msk [vmem:[#allocation3 + $0x30] sm:$0xff] %vm565, %v563
          %573 = vst.msk [vmem:[#allocation3 + $0x38] sm:$0xff] %vm565, %v564
        $region84: #{tpu_custom_call.1} parent=67 // pred_fallthru
          _
        %v574 = vld [vmem:[%s547] sm:$0x3]
        %v575 = vld [vmem:[#allocation2] sm:$0x3]
        %v576 = vld [vmem:[#allocation3] sm:$0xff]
        %v577 = vld [vmem:[#allocation3 + $0x8] sm:$0xff]
        %v578 = vld [vmem:[#allocation3 + $0x10] sm:$0xff]
        %v579 = vld [vmem:[#allocation3 + $0x18] sm:$0xff]
        %v580 = vld [vmem:[#allocation3 + $0x20] sm:$0xff]
        %v581 = vld [vmem:[#allocation3 + $0x28] sm:$0xff]
        %v582 = vld [vmem:[#allocation3 + $0x30] sm:$0xff]
        %v583 = vld [vmem:[#allocation3 + $0x38] sm:$0xff]
        %s584 = sld [smem:[#allocation10]]
        %s585 = sld [smem:[#allocation10 + $0x1]]
        %v586 = vld [vmem:[%s4] sm:$0xff]
        %v587 = vld [vmem:[%s4 + $0x8] sm:$0xff]
        %v588 = vld [vmem:[%s4 + $0x10] sm:$0xff]
        %v589 = vld [vmem:[%s4 + $0x18] sm:$0xff]
        %v590 = vlaneseq
        %v591 = vshrl.u32 %v590, 7
        %v592 = vsub.s32 0, %v591
        %v593 = vrot.slane %v575, %v592
        %595 = vbcast.lane.b32.xlu0 %v593, 256
        %v596 = vpop.permute.xlu0 %595
        %s598 = sor.u32 256, 8
        %599 = vbcast.lane.b32.xlu0 %v593, %s598
        %v600 = vpop.permute.xlu0 %599
        %s602 = sor.u32 256, 16
        %603 = vbcast.lane.b32.xlu0 %v593, %s602
        %v604 = vpop.permute.xlu0 %603
        %s606 = sor.u32 256, 24
        %607 = vbcast.lane.b32.xlu0 %v593, %s606
        %v608 = vpop.permute.xlu0 %607
        %v609 = vlaneseq
        %v610 = vshrl.u32 %v609, 7
        %v611 = vsub.s32 1, %v610
        %v612 = vrot.slane %v575, %v611
        %614 = vbcast.lane.b32.xlu0 %v612, 256
        %v615 = vpop.permute.xlu0 %614
        %s617 = sor.u32 256, 8
        %618 = vbcast.lane.b32.xlu0 %v612, %s617
        %v619 = vpop.permute.xlu0 %618
        %s621 = sor.u32 256, 16
        %622 = vbcast.lane.b32.xlu0 %v612, %s621
        %v623 = vpop.permute.xlu0 %622
        %s625 = sor.u32 256, 24
        %626 = vbcast.lane.b32.xlu0 %v612, %s625
        %v627 = vpop.permute.xlu0 %626
        %v628 = vld [vmem:[%s5] sm:$0xff]
        %v629 = vld [vmem:[%s5 + $0x8] sm:$0xff]
        %v630 = vld [vmem:[%s5 + $0x10] sm:$0xff]
        %v631 = vld [vmem:[%s5 + $0x18] sm:$0xff]
        %v632 = vmul.f32 %v628, %v576
        %v633 = vmul.f32 %v629, %v577
        %v634 = vmul.f32 %v630, %v578
        %v635 = vmul.f32 %v631, %v579
        %v636 = vmul.f32 %v628, %v580
        %v637 = vmul.f32 %v629, %v581
        %v638 = vmul.f32 %v630, %v582
        %v639 = vmul.f32 %v631, %v583
        %v640 = vmul.f32 %v596, %v632
        %v641 = vmul.f32 %v600, %v633
        %v642 = vmul.f32 %v604, %v634
        %v643 = vmul.f32 %v608, %v635
        %v644 = vmul.f32 %v615, %v636
        %v645 = vmul.f32 %v619, %v637
        %v646 = vmul.f32 %v623, %v638
        %v647 = vmul.f32 %v627, %v639
        %vm648 = vcmask 261120
        %v649 = vsel %vm648, %v640, 0.0
        %v650 = vsel %vm648, %v641, 0.0
        %v651 = vadd.f32 %v649, %v650
        %v652 = vsel %vm648, %v642, 0.0
        %v653 = vadd.f32 %v651, %v652
        %v654 = vsel %vm648, %v643, 0.0
        %v655 = vadd.f32 %v653, %v654
        %v656 = vrot.slane %v655, 4
        %v657 = vadd.f32 %v655, %v656
        %v658 = vrot.slane %v657, 2
        %v659 = vadd.f32 %v657, %v658
        %v660 = vrot.slane %v659, 1
        %v661 = vadd.f32 %v659, %v660
        %v662 = vsel %vm648, %v644, 0.0
        %v663 = vsel %vm648, %v645, 0.0
        %v664 = vadd.f32 %v662, %v663
        %v665 = vsel %vm648, %v646, 0.0
        %v666 = vadd.f32 %v664, %v665
        %v667 = vsel %vm648, %v647, 0.0
        %v668 = vadd.f32 %v666, %v667
        %v669 = vrot.slane %v668, 4
        %v670 = vadd.f32 %v668, %v669
        %v671 = vrot.slane %v670, 2
        %v672 = vadd.f32 %v670, %v671
        %v673 = vrot.slane %v672, 1
        %v674 = vadd.f32 %v672, %v673
        %vm677 = vcmask 1041409
        %v678 = vsel %vm677, %v674, %v661
        %v681 = vsel %vm648, %v575, 0
        %683 = vmatprep.subr.mxu0 0.0
        %684 = vmatpush1.msra.mxu0 %v586
        %685 = vmatprep.subr.mxu0 0.0
        %686 = vmatpush1.msra.mxu0 %v587
        %687 = vmatprep.subr.mxu0 0.0
        %688 = vmatpush1.msra.mxu0 %v588
        %689 = vmatprep.subr.mxu0 0.0
        %690 = vmatpush1.msra.mxu0 %v589
        %691 = vmatprep.subr.mxu0 0.0
        %692 = vmatpush1.msra.mxu0 0.0
        %693 = vmatprep.subr.mxu0 0.0
        %694 = vmatpush1.msra.mxu0 0.0
        %695 = vmatprep.subr.mxu0 0.0
        %696 = vmatpush1.msra.mxu0 0.0
        %697 = vmatprep.subr.mxu0 0.0
        %698 = vmatpush1.msra.mxu0 0.0
        %699 = vmatprep.subr.mxu0 0.0
        %700 = vmatpush1.msra.mxu0 0.0
        %701 = vmatprep.subr.mxu0 0.0
        %702 = vmatpush1.msra.mxu0 0.0
        %703 = vmatprep.subr.mxu0 0.0
        %704 = vmatpush1.msra.mxu0 0.0
        %705 = vmatprep.subr.mxu0 0.0
        %706 = vmatpush1.msra.mxu0 0.0
        %707 = vmatprep.subr.mxu0 0.0
        %708 = vmatpush1.msra.mxu0 0.0
        %709 = vmatprep.subr.mxu0 0.0
        %710 = vmatpush1.msra.mxu0 0.0
        %711 = vmatprep.subr.mxu0 0.0
        %712 = vmatpush1.msra.mxu0 0.0
        %713 = vmatprep.subr.mxu0 0.0
        %714 = vmatpush1.msra.mxu0 0.0
        %715 = vmatprep.subr.mxu0 0.0
        %716 = vmatpush1.msra.mxu0 0.0
        %717 = vmatprep.subr.mxu0 0.0
        %718 = vmatpush1.msra.mxu0 0.0
        %719 = vmatprep.subr.mxu0 0.0
        %720 = vmatpush1.msra.mxu0 0.0
        %721 = vmatprep.subr.mxu0 0.0
        %722 = vmatpush1.msra.mxu0 0.0
        %723 = vmatprep.subr.mxu0 0.0
        %724 = vmatpush1.msra.mxu0 0.0
        %725 = vmatprep.subr.mxu0 0.0
        %726 = vmatpush1.msra.mxu0 0.0
        %727 = vmatprep.subr.mxu0 0.0
        %728 = vmatpush1.msra.mxu0 0.0
        %729 = vmatprep.subr.mxu0 0.0
        %730 = vmatpush1.msra.mxu0 0.0
        %731 = vmatprep.subr.mxu0 0.0
        %732 = vmatpush1.msra.mxu0 0.0
        %733 = vmatprep.subr.mxu0 0.0
        %734 = vmatpush1.msra.mxu0 0.0
        %735 = vmatprep.subr.mxu0 0.0
        %736 = vmatpush1.msra.mxu0 0.0
        %737 = vmatprep.subr.mxu0 0.0
        %738 = vmatpush1.msra.mxu0 0.0
        %739 = vmatprep.subr.mxu0 0.0
        %740 = vmatpush1.msra.mxu0 0.0
        %741 = vmatprep.subr.mxu0 0.0
        %742 = vmatpush1.msra.mxu0 0.0
        %743 = vmatprep.subr.mxu0 0.0
        %744 = vmatpush1.msra.mxu0 0.0
        %745 = vmatprep.subr.mxu0 0.0
        %746 = vmatpush1.msra.mxu0 0.0
        %747 = vmatprep.mubr.f32.mxu0 0.0
        %748 = vmatmul.mubr.f32.gmra.mrb[0].mxu0 %v681
        %v749 = vpop.f32.mrb[0].mxu0
        %v750 = vadd.f32 %v678, %v749
        %v751 = vpop.f32.mrb[0].mxu0
        %752 = vdwg.mxu0
        %v753 = vld [vmem:[%s3] sm:$0xff]
        %v754 = vld [vmem:[%s3 + $0x8] sm:$0xff]
        %vm755 = vcmask 130048
        %v757 = vsel %vm755, %v574, 0
        %759 = vmatprep.subr.mxu0 0.0
        %760 = vmatpush1.msra.mxu0 %v753
        %761 = vmatprep.subr.mxu0 0.0
        %762 = vmatpush1.msra.mxu0 %v754
        %763 = vmatprep.subr.mxu0 0.0
        %764 = vmatpush1.msra.mxu0 0.0
        %765 = vmatprep.subr.mxu0 0.0
        %766 = vmatpush1.msra.mxu0 0.0
        %767 = vmatprep.subr.mxu0 0.0
        %768 = vmatpush1.msra.mxu0 0.0
        %769 = vmatprep.subr.mxu0 0.0
        %770 = vmatpush1.msra.mxu0 0.0
        %771 = vmatprep.subr.mxu0 0.0
        %772 = vmatpush1.msra.mxu0 0.0
        %773 = vmatprep.subr.mxu0 0.0
        %774 = vmatpush1.msra.mxu0 0.0
        %775 = vmatprep.subr.mxu0 0.0
        %776 = vmatpush1.msra.mxu0 0.0
        %777 = vmatprep.subr.mxu0 0.0
        %778 = vmatpush1.msra.mxu0 0.0
        %779 = vmatprep.subr.mxu0 0.0
        %780 = vmatpush1.msra.mxu0 0.0
        %781 = vmatprep.subr.mxu0 0.0
        %782 = vmatpush1.msra.mxu0 0.0
        %783 = vmatprep.subr.mxu0 0.0
        %784 = vmatpush1.msra.mxu0 0.0
        %785 = vmatprep.subr.mxu0 0.0
        %786 = vmatpush1.msra.mxu0 0.0
        %787 = vmatprep.subr.mxu0 0.0
        %788 = vmatpush1.msra.mxu0 0.0
        %789 = vmatprep.subr.mxu0 0.0
        %790 = vmatpush1.msra.mxu0 0.0
        %791 = vmatprep.subr.mxu0 0.0
        %792 = vmatpush1.msra.mxu0 0.0
        %793 = vmatprep.subr.mxu0 0.0
        %794 = vmatpush1.msra.mxu0 0.0
        %795 = vmatprep.subr.mxu0 0.0
        %796 = vmatpush1.msra.mxu0 0.0
        %797 = vmatprep.subr.mxu0 0.0
        %798 = vmatpush1.msra.mxu0 0.0
        %799 = vmatprep.subr.mxu0 0.0
        %800 = vmatpush1.msra.mxu0 0.0
        %801 = vmatprep.subr.mxu0 0.0
        %802 = vmatpush1.msra.mxu0 0.0
        %803 = vmatprep.subr.mxu0 0.0
        %804 = vmatpush1.msra.mxu0 0.0
        %805 = vmatprep.subr.mxu0 0.0
        %806 = vmatpush1.msra.mxu0 0.0
        %807 = vmatprep.subr.mxu0 0.0
        %808 = vmatpush1.msra.mxu0 0.0
        %809 = vmatprep.subr.mxu0 0.0
        %810 = vmatpush1.msra.mxu0 0.0
        %811 = vmatprep.subr.mxu0 0.0
        %812 = vmatpush1.msra.mxu0 0.0
        %813 = vmatprep.subr.mxu0 0.0
        %814 = vmatpush1.msra.mxu0 0.0
        %815 = vmatprep.subr.mxu0 0.0
        %816 = vmatpush1.msra.mxu0 0.0
        %817 = vmatprep.subr.mxu0 0.0
        %818 = vmatpush1.msra.mxu0 0.0
        %819 = vmatprep.subr.mxu0 0.0
        %820 = vmatpush1.msra.mxu0 0.0
        %821 = vmatprep.subr.mxu0 0.0
        %822 = vmatpush1.msra.mxu0 0.0
        %823 = vmatprep.mubr.f32.mxu0 0.0
        %824 = vmatmul.mubr.f32.gmra.mrb[0].mxu0 %v757
        %v825 = vpop.f32.mrb[0].mxu0
        %v826 = vadd.f32 %v750, %v825
        %v827 = vpop.f32.mrb[0].mxu0
        %828 = vdwg.mxu0
        %v829 = vld [vmem:[%s6] sm:$0x1]
        %v831 = vlaneseq
        %v832 = vshrl.u32 %v831, 7
        %v833 = vsub.s32 0, %v832
        %v834 = vrot.slane %v829, %v833
        %v836 = vadd.f32 %v826, %v834
        %vm837 = vcmask 254976
        %v838 = vsel %vm837, %v836, 0.0
        %839 = vadd.xlane.f32.xlu0 %v838
        %v840 = vpop.xlane.xlu0 %839
        %v841 = vrcp.pop 32.0
        %v842 = vmul.f32 %v840, %v841
        %v843 = vsub.f32 %v836, %v842
        %v844 = vmul.f32 %v843, %v843
        %v845 = vsel %vm837, %v844, 0.0
        %846 = vadd.xlane.f32.xlu0 %v845
        %v847 = vpop.xlane.xlu0 %846
        %v848 = vmul.f32 %v847, %v841
        %v849 = vadd.f32 %v848, 1e-05
        %v850 = vrsqrt.pop %v849
        %v851 = vmul.f32 %v843, %v850
        %v852 = vld [vmem:[%s7] sm:$0x1]
        %v854 = vlaneseq
        %v855 = vshrl.u32 %v854, 7
        %v856 = vsub.s32 0, %v855
        %v857 = vrot.slane %v852, %v856
        %v859 = vmul.f32 %v851, %v857
        %v860 = vld [vmem:[%s8] sm:$0x1]
        %v862 = vlaneseq
        %v863 = vshrl.u32 %v862, 7
        %v864 = vsub.s32 0, %v863
        %v865 = vrot.slane %v860, %v864
        %v867 = vadd.f32 %v859, %v865
        %v868 = vtanh.pop %v867
        %v869 = vstv %s585
        %v870 = vmul.f32 %v869, %v576
        %v871 = vmul.f32 %v869, %v577
        %v872 = vmul.f32 %v869, %v578
        %v873 = vmul.f32 %v869, %v579
        %v874 = vmul.f32 %v869, %v580
        %v875 = vmul.f32 %v869, %v581
        %v876 = vmul.f32 %v869, %v582
        %v877 = vmul.f32 %v869, %v583
        %v880 = vunpack.c.l.s4 1966171168
        %v881 = vunpack.c.0.s8 %v880
        %v882 = vlaneseq
        %v883 = vshrl.u32 %v882, 7
        %v884 = vsub.s32 %v881, %v883
        %v885 = vrot.slane %v868, %v884
        %v886 = vcombine.high %v885, %v885
        %v888 = vunpack.c.l.s4 1966171168
        %v889 = vunpack.c.0.s8 %v888
        %v890 = vlaneseq
        %v891 = vshrl.u32 %v890, 7
        %v892 = vsub.s32 %v889, %v891
        %v893 = vrot.slane %v885, %v892
        %v895 = vunpack.c.l.s4 1966171168
        %v896 = vunpack.c.0.s8 %v895
        %v897 = vlaneseq
        %v898 = vshrl.u32 %v897, 7
        %v899 = vsub.s32 %v896, %v898
        %v900 = vrot.slane %v886, %v899
        %v901 = vlaneseq
        %v902 = vshrl.u32 %v901, 7
        %v903 = vsub.s32 0, %v902
        %v904 = vrot.slane %v893, %v903
        %v905 = vlaneseq
        %v906 = vshrl.u32 %v905, 7
        %v907 = vsub.s32 0, %v906
        %v908 = vrot.slane %v900, %v907
        %v911 = vmul.f32 %v596, %v904
        %v912 = vmul.f32 %v600, %v904
        %v913 = vmul.f32 %v604, %v904
        %v914 = vmul.f32 %v608, %v904
        %v915 = vmul.f32 %v615, %v908
        %v916 = vmul.f32 %v619, %v908
        %v917 = vmul.f32 %v623, %v908
        %v918 = vmul.f32 %v627, %v908
        %v919 = vstv %s584
        %v920 = vmul.f32 %v919, %v911
        %v921 = vmul.f32 %v919, %v912
        %v922 = vmul.f32 %v919, %v913
        %v923 = vmul.f32 %v919, %v914
        %v924 = vmul.f32 %v919, %v915
        %v925 = vmul.f32 %v919, %v916
        %v926 = vmul.f32 %v919, %v917
        %v927 = vmul.f32 %v919, %v918
        %v928 = vadd.f32 %v870, %v920
        %v929 = vadd.f32 %v871, %v921
        %v930 = vadd.f32 %v872, %v922
        %v931 = vadd.f32 %v873, %v923
        %v932 = vadd.f32 %v874, %v924
        %v933 = vadd.f32 %v875, %v925
        %v934 = vadd.f32 %v876, %v926
        %v935 = vadd.f32 %v877, %v927
        %936 = vst.msk [vmem:[#allocation2] sm:$0x3] %vm837, %v868
        %937 = vst.msk [vmem:[#allocation3] sm:$0xff] %vm648, %v928
        %938 = vst.msk [vmem:[#allocation3 + $0x8] sm:$0xff] %vm648, %v929
        %939 = vst.msk [vmem:[#allocation3 + $0x10] sm:$0xff] %vm648, %v930
        %940 = vst.msk [vmem:[#allocation3 + $0x18] sm:$0xff] %vm648, %v931
        %941 = vst.msk [vmem:[#allocation3 + $0x20] sm:$0xff] %vm648, %v932
        %942 = vst.msk [vmem:[#allocation3 + $0x28] sm:$0xff] %vm648, %v933
        %943 = vst.msk [vmem:[#allocation3 + $0x30] sm:$0xff] %vm648, %v934
        %944 = vst.msk [vmem:[#allocation3 + $0x38] sm:$0xff] %vm648, %v935
        %v945 = vld [vmem:[%s9] sm:$0xff]
        %v946 = vld [vmem:[%s9 + $0x8] sm:$0xff]
        %v947 = vld [vmem:[%s9 + $0x10] sm:$0xff]
        %v948 = vld [vmem:[%s9 + $0x18] sm:$0xff]
        %v949 = vld [vmem:[%s10] sm:$0x1]
        %v951 = vlaneseq
        %v952 = vshrl.u32 %v951, 7
        %v953 = vsub.s32 0, %v952
        %v954 = vrot.slane %v949, %v953
        %v956 = vsel %vm648, %v868, 0
        %958 = vmatprep.subr.mxu0 0.0
        %959 = vmatpush1.msra.mxu0 %v945
        %960 = vmatprep.subr.mxu0 0.0
        %961 = vmatpush1.msra.mxu0 %v946
        %962 = vmatprep.subr.mxu0 0.0
        %963 = vmatpush1.msra.mxu0 %v947
        %964 = vmatprep.subr.mxu0 0.0
        %965 = vmatpush1.msra.mxu0 %v948
        %966 = vmatprep.subr.mxu0 0.0
        %967 = vmatpush1.msra.mxu0 0.0
        %968 = vmatprep.subr.mxu0 0.0
        %969 = vmatpush1.msra.mxu0 0.0
        %970 = vmatprep.subr.mxu0 0.0
        %971 = vmatpush1.msra.mxu0 0.0
        %972 = vmatprep.subr.mxu0 0.0
        %973 = vmatpush1.msra.mxu0 0.0
        %974 = vmatprep.subr.mxu0 0.0
        %975 = vmatpush1.msra.mxu0 0.0
        %976 = vmatprep.subr.mxu0 0.0
        %977 = vmatpush1.msra.mxu0 0.0
        %978 = vmatprep.subr.mxu0 0.0
        %979 = vmatpush1.msra.mxu0 0.0
        %980 = vmatprep.subr.mxu0 0.0
        %981 = vmatpush1.msra.mxu0 0.0
        %982 = vmatprep.subr.mxu0 0.0
        %983 = vmatpush1.msra.mxu0 0.0
        %984 = vmatprep.subr.mxu0 0.0
        %985 = vmatpush1.msra.mxu0 0.0
        %986 = vmatprep.subr.mxu0 0.0
        %987 = vmatpush1.msra.mxu0 0.0
        %988 = vmatprep.subr.mxu0 0.0
        %989 = vmatpush1.msra.mxu0 0.0
        %990 = vmatprep.subr.mxu0 0.0
        %991 = vmatpush1.msra.mxu0 0.0
        %992 = vmatprep.subr.mxu0 0.0
        %993 = vmatpush1.msra.mxu0 0.0
        %994 = vmatprep.subr.mxu0 0.0
        %995 = vmatpush1.msra.mxu0 0.0
        %996 = vmatprep.subr.mxu0 0.0
        %997 = vmatpush1.msra.mxu0 0.0
        %998 = vmatprep.subr.mxu0 0.0
        %999 = vmatpush1.msra.mxu0 0.0
        %1000 = vmatprep.subr.mxu0 0.0
        %1001 = vmatpush1.msra.mxu0 0.0
        %1002 = vmatprep.subr.mxu0 0.0
        %1003 = vmatpush1.msra.mxu0 0.0
        %1004 = vmatprep.subr.mxu0 0.0
        %1005 = vmatpush1.msra.mxu0 0.0
        %1006 = vmatprep.subr.mxu0 0.0
        %1007 = vmatpush1.msra.mxu0 0.0
        %1008 = vmatprep.subr.mxu0 0.0
        %1009 = vmatpush1.msra.mxu0 0.0
        %1010 = vmatprep.subr.mxu0 0.0
        %1011 = vmatpush1.msra.mxu0 0.0
        %1012 = vmatprep.subr.mxu0 0.0
        %1013 = vmatpush1.msra.mxu0 0.0
        %1014 = vmatprep.subr.mxu0 0.0
        %1015 = vmatpush1.msra.mxu0 0.0
        %1016 = vmatprep.subr.mxu0 0.0
        %1017 = vmatpush1.msra.mxu0 0.0
        %1018 = vmatprep.subr.mxu0 0.0
        %1019 = vmatpush1.msra.mxu0 0.0
        %1020 = vmatprep.subr.mxu0 0.0
        %1021 = vmatpush1.msra.mxu0 0.0
        %1022 = vmatprep.mubr.f32.mxu0 0.0
        %1023 = vmatmul.mubr.f32.gmra.mrb[0].mxu0 %v956
        %v1024 = vpop.f32.mrb[0].mxu0
        %v1025 = vadd.f32 %v954, %v1024
        %v1026 = vpop.f32.mrb[0].mxu0
        %1027 = vdwg.mxu0
        %1028 = vst [vmem:[%s540] sm:$0x3] %v1025
        %p1029 = scmp.eq.s32.totalorder %s36, 7
        // Predicated region
        $region85: #{tpu_custom_call.1} parent=67 // pred_check
          %p1030 = pneg %p1029
        $region86: #{tpu_custom_call.1} parent=67 // pred_check_branch
          %1032 = sbr.rel (%p1030) target = $region88
        $region87: #{tpu_custom_call.1} parent=67 // pred_region
          %1033 = vst.msk [vmem:[#allocation11] sm:$0x3] %vm837, %v868
          %1034 = vst.msk [vmem:[#allocation12] sm:$0xff] %vm648, %v928
          %1035 = vst.msk [vmem:[#allocation12 + $0x8] sm:$0xff] %vm648, %v929
          %1036 = vst.msk [vmem:[#allocation12 + $0x10] sm:$0xff] %vm648, %v930
          %1037 = vst.msk [vmem:[#allocation12 + $0x18] sm:$0xff] %vm648, %v931
          %1038 = vst.msk [vmem:[#allocation12 + $0x20] sm:$0xff] %vm648, %v932
          %1039 = vst.msk [vmem:[#allocation12 + $0x28] sm:$0xff] %vm648, %v933
          %1040 = vst.msk [vmem:[#allocation12 + $0x30] sm:$0xff] %vm648, %v934
          %1041 = vst.msk [vmem:[#allocation12 + $0x38] sm:$0xff] %vm648, %v935
        $region88: #{tpu_custom_call.1} parent=67 // pred_fallthru
          _
        %s1042 = sand.u32 %s31, 1
        %s1043 = scalar_lea.sflag [#allocation6], %s1042
        %s1044 = sand.u32 %s374, 1
        %s1045 = smul.addr %s1044, 2
        %s1046 = scalar_lea.vmem [#allocation14], %s1045
        // Predicated region
        $region89: #{tpu_custom_call.1} parent=67 // pred_check
          %p1047 = pneg %p330
        $region90: #{tpu_custom_call.1} parent=67 // pred_check_branch
          %1049 = sbr.rel (%p1047) target = $region92
        $region91: #{tpu_custom_call.1} parent=67 // pred_region
          %s1051 = ssub.s32 32, 32
          %1052 = vsyncadd [#allocation6], %s1051
          %s1053 = smul.addr %s35, 32
          %s1054 = scalar_lea.hbm %s12, %s1053
          %s1056 = sshll.u32 [#allocation11], 4
          %s1057 = int_to_ptr.vmem [resolvable:$true] %s1056
          %1059 = dma.vmem_to_hbm [thread:$0]  %s1057, 32, %s1054, [#allocation6]
        $region92: #{tpu_custom_call.1} parent=67 // pred_fallthru
          _
        // Predicated region
        $region93: #{tpu_custom_call.1} parent=67 // pred_check
          %p1060 = pneg %p356
        $region94: #{tpu_custom_call.1} parent=67 // pred_check_branch
          %1062 = sbr.rel (%p1060) target = $region96
        $region95: #{tpu_custom_call.1} parent=67 // pred_region
          %s1063 = smul.u32 2, %s35
          %s1065 = ssub.s32 1024, 1024
          %1066 = vsyncadd [#allocation13], %s1065
          %s1067 = smul.addr %s1063, 4
          %s1068 = smul.addr %s1067, 128
          %s1069 = scalar_lea.hbm %s13, %s1068
          %s1070 = sshll.u32 [#allocation12], 4
          %s1071 = int_to_ptr.vmem [resolvable:$true] %s1070
          %1076 = dma.vmem_to_hbm [thread:$0]  %s1071, 1024, %s1069, [#allocation13], 128, 128, 8
        $region96: #{tpu_custom_call.1} parent=67 // pred_fallthru
          _
        // Predicated region
        $region97: #{tpu_custom_call.1} parent=67 // pred_check
          %p1077 = pneg %p384
        $region98: #{tpu_custom_call.1} parent=67 // pred_check_branch
          %1079 = sbr.rel (%p1077) target = $region100
        $region99: #{tpu_custom_call.1} parent=67 // pred_region
          %s1081 = ssub.s32 32, 32
          %1082 = vsyncadd %s1043, %s1081
          %s1083 = sadd.s32 %s35, %s36
          %s1084 = smul.addr %s1083, 32
          %s1085 = scalar_lea.hbm %s14, %s1084
          %s1087 = sshll.u32 %s1046, 4
          %s1088 = int_to_ptr.vmem [resolvable:$true] %s1087
          %1090 = dma.vmem_to_hbm [thread:$0]  %s1088, 32, %s1085, %s1043
        $region100: #{tpu_custom_call.1} parent=67 // pred_fallthru
          _
        // Predicated region
        $region101: #{tpu_custom_call.1} parent=67 // pred_check
          %p1091 = pneg %p330
        $region102: #{tpu_custom_call.1} parent=67 // pred_check_branch
          %1093 = sbr.rel (%p1091) target = $region104
        $region103: #{tpu_custom_call.1} parent=67 // pred_region
          %1094 = dma.done [#allocation6], 32
        $region104: #{tpu_custom_call.1} parent=67 // pred_fallthru
          _
        // Predicated region
        $region105: #{tpu_custom_call.1} parent=67 // pred_check
          %p1095 = pneg %p356
        $region106: #{tpu_custom_call.1} parent=67 // pred_check_branch
          %1097 = sbr.rel (%p1095) target = $region108
        $region107: #{tpu_custom_call.1} parent=67 // pred_region
          %1098 = dma.done [#allocation13], 1024
        $region108: #{tpu_custom_call.1} parent=67 // pred_fallthru
          _
      $region68: #{tpu_custom_call.1} parent=5 // pred_fallthru
        _
      %p1099 = scmp.le.s32.totalorder 2, %s26
      // Predicated region
      $region109: #{tpu_custom_call.1} parent=5 // pred_check
        %p1100 = pneg %p1099
      $region110: #{tpu_custom_call.1} parent=5 // pred_check_branch
        %1102 = sbr.rel (%p1100) target = $region112
      $region111: #{tpu_custom_call.1} parent=5 // pred_region
        %s1103 = ssub.s32 %s26, 2
        // Predicated region
        $region113: #{tpu_custom_call.1} parent=111 // pred_check
          %p1104 = pneg %p390
        $region114: #{tpu_custom_call.1} parent=111 // pred_check_branch
          %1106 = sbr.rel (%p1104) target = $region116
        $region115: #{tpu_custom_call.1} parent=111 // pred_region
          %s1107 = sand.u32 %s32, 1
          %s1108 = scalar_lea.sflag [#allocation6], %s1107
          %s1109 = sand.u32 %s375, 1
          %s1110 = smul.addr %s1109, 2
          %s1111 = scalar_lea.vmem [#allocation14], %s1110
          %1112 = dma.done %s1108, 32
        $region116: #{tpu_custom_call.1} parent=111 // pred_fallthru
          _
      $region112: #{tpu_custom_call.1} parent=5 // pred_fallthru
        _
    $region6: #{tpu_custom_call.1} parent=1 // loop_footer
      %s30 = sadd.s32 1, %s26
    $region7: #{tpu_custom_call.1} parent=1 // loop_footer_branch
      %25 = sbr.rel target = $region3
    $region8: #{tpu_custom_call.1} parent=1 // loop_exit
      _
    %1113 = vsyncpa [#allocation5], 1
    %s1114 = scalar_lea.sflag [#allocation5], 1
    %1115 = vsyncpa %s1114, 1
    %1116 = vsyncpa [#allocation9], 1
    %1117 = vsyncpa [#allocation6], 1
    %s1118 = scalar_lea.sflag [#allocation6], 1
    %1119 = vsyncpa %s1118, 1
    %1120 = vsyncpa [#allocation13], 1
    %1121 = vsyncpa [#allocation7], 1
    %s1122 = scalar_lea.sflag [#allocation7], 1
    %1123 = vsyncpa %s1122, 1

</llo_original>
